<compile_context>
chip_gen: v6e
topology: v6e:2x2x1
jax: 0.10.0
libtpu: 0.0.40
codegen_flags: <defaults>
</compile_context>

<pallas_src>
import functools

import jax
import jax.numpy as jnp
from jax.experimental import pallas as pl
from jax.experimental.pallas import tpu as pltpu

LIPSCHITZ = 0.9
KH, KW = 3, 3


def _round_up(x, m):
    return (x + m - 1) // m * m


def _lipschitz_conv_kernel(x_ref, w_ref, b_ref, o_ref, taps_ref, *,
                           wp, margin, lane_tile, n_chunks, cin_p):
    # x_ref   : (1, Cin_p, Wext)   flattened, margin-padded plane (resident per n)
    # w_ref   : (Cout_t, 9*Cin_p)  weight slab, Lipschitz-scaled, cols = (dy,dx,ci)
    # b_ref   : (Cout_t, 1)        bias, Lipschitz-scaled, f32
    # o_ref   : (1, Cout_t, Lp)    lane-dense flattened padded-plane output
    # taps_ref: (9*Cin_p, lane_tile) VMEM scratch for the im2col tap stack
    w = w_ref[...]
    b = b_ref[...]
    for c in range(n_chunks):                       # static unroll; bounds VMEM
        base = margin + c * lane_tile
        # Build the tap stack with one aligned store per tap (no concat).
        for t in range(KH * KW):
            dy, dx = t // KW, t % KW
            start = base + (dy - 1) * wp + (dx - 1)  # static offset, inside margin
            taps_ref[t * cin_p:(t + 1) * cin_p, :] = (
                x_ref[0, :, start:start + lane_tile].astype(taps_ref.dtype))
        # One MXU contraction per chunk, f32 accumulation.
        acc = jnp.dot(w, taps_ref[...], preferred_element_type=jnp.float32)
        # Epilogue: bias only (Lipschitz constant already folded into w and b).
        o_ref[0, :, c * lane_tile:(c + 1) * lane_tile] = (acc + b).astype(o_ref.dtype)


def lipschitz_constrained_conv(x_nchw, w_oihw, bias, *, lipschitz=LIPSCHITZ,
                               compute_dtype=None):
    """y = (conv3x3_same(x) + bias) * lipschitz, NCHW in / NCHW out."""
    N, Cin, H, W = x_nchw.shape
    Cout = w_oihw.shape[0]

    if compute_dtype is None:
        # Keep f32 MXU operands unless the model is already bf16; pass
        # jnp.bfloat16 explicitly for large-C f32 models where the dot dominates.
        compute_dtype = jnp.bfloat16 if x_nchw.dtype == jnp.bfloat16 else jnp.float32
    compute_dtype = jnp.dtype(compute_dtype)
    out_dtype = jnp.dtype(x_nchw.dtype)
    c_sz = compute_dtype.itemsize
    x_sz = out_dtype.itemsize

    # Sublane-aligned channel counts (8 for 32-bit, 16 for 16-bit).
    cin_align = 8 * (4 // c_sz)
    cout_align = 8 * (4 // x_sz)
    Cin_p = _round_up(Cin, cin_align)
    Cout_p = _round_up(Cout, cout_align)

    Hp, Wp = H + 2, W + 2                 # SAME padding for a 3x3 kernel
    L = Hp * Wp                           # flattened padded plane length
    margin = 2 * Wp                       # whole-row margin (>= Wp+1 tap reach)

    # Lane chunk: multiple of 128, capped so the tap scratch stays ~<=4 MiB.
    lp_base = _round_up(L, 128)
    max_by_vmem = max(128, ((4 << 20) // (9 * Cin_p * c_sz)) // 128 * 128)
    lane_tile = max(128, min(2048, lp_base, max_by_vmem))
    Lp = _round_up(L, lane_tile)
    n_chunks = Lp // lane_tile

    # Trailing whole rows: lane-rounding tail + forward tap reach (Wp+1).
    tail_rows = -(-(Lp - L + Wp + 1) // Wp)
    n_rows = 2 + Hp + tail_rows
    Wext = n_rows * Wp

    # Single fused pad (one HBM pass): channel pad + halo + margin + tail rows,
    # then a free reshape to the flattened extended plane.
    x_ext = jnp.pad(
        x_nchw,
        ((0, 0), (0, Cin_p - Cin), (1 + 2, 1 + tail_rows), (1, 1)),
    ).reshape(N, Cin_p, Wext)

    # Weight slab (Cout_p, 9*Cin_p); column order (dy, dx, ci) matches the tap
    # stack.  Lipschitz constant folded into weights and bias.
    w_p = jnp.zeros((Cout_p, Cin_p, KH, KW), w_oihw.dtype).at[:Cout, :Cin].set(w_oihw)
    w2d = (jnp.transpose(w_p, (0, 2, 3, 1)).reshape(Cout_p, KH * KW * Cin_p)
           * lipschitz).astype(compute_dtype)
    b_col = jnp.zeros((Cout_p, 1), jnp.float32).at[:Cout, 0].set(
        bias.astype(jnp.float32) * lipschitz)

    # Cout tiling: extra parallel grid steps when Cout is large (v7x 2 TCs).
    cout_tile = 128 if (Cout_p % 128 == 0 and Cout_p > 128) else Cout_p
    n_cout_tiles = Cout_p // cout_tile

    kernel = functools.partial(
        _lipschitz_conv_kernel, wp=Wp, margin=margin, lane_tile=lane_tile,
        n_chunks=n_chunks, cin_p=Cin_p)

    # Explicit VMEM budget (double-buffered blocks + tap scratch) + cost hint.
    est_vmem = (2 * Cin_p * Wext * x_sz
                + 2 * cout_tile * Lp * x_sz
                + 2 * cout_tile * KH * KW * Cin_p * c_sz
                + 2 * cout_tile * 4
                + 9 * Cin_p * lane_tile * c_sz)
    vmem_limit = min(max(int(1.5 * est_vmem) + (4 << 20), 32 << 20), 96 << 20)

    cost = pl.CostEstimate(
        flops=2 * N * Cout * Cin * KH * KW * H * W,
        transcendentals=0,
        bytes_accessed=(x_nchw.size * x_sz + w2d.size * c_sz + b_col.size * 4
                        + N * Cout * H * W * x_sz),
    )

    out_flat = pl.pallas_call(
        kernel,
        out_shape=jax.ShapeDtypeStruct((N, Cout_p, Lp), out_dtype),
        grid=(N, n_cout_tiles),
        in_specs=[
            pl.BlockSpec((1, Cin_p, Wext), lambda n, j: (n, 0, 0)),
            pl.BlockSpec((cout_tile, KH * KW * Cin_p), lambda n, j: (j, 0)),
            pl.BlockSpec((cout_tile, 1), lambda n, j: (j, 0)),
        ],
        out_specs=pl.BlockSpec((1, cout_tile, Lp), lambda n, j: (n, j, 0)),
        scratch_shapes=[pltpu.VMEM((KH * KW * Cin_p, lane_tile), compute_dtype)],
        compiler_params=pltpu.CompilerParams(
            dimension_semantics=("parallel", "parallel"),
            vmem_limit_bytes=vmem_limit,
        ),
        cost_estimate=cost,
    )(x_ext, w2d, b_col)

    # Interior extraction: drop channel/lane padding, unflatten, strip the halo.
    out = (out_flat[:, :Cout, :L]
           .reshape(N, Cout, Hp, Wp)[:, :, 1:1 + H, 1:1 + W])
    return out


def _reference(x_nchw, w_oihw, bias):
    y = jax.lax.conv_general_dilated(
        x_nchw, w_oihw,
        window_strides=(1, 1),
        padding="SAME",
        dimension_numbers=("NCHW", "OIHW", "NCHW"),
    )
    y = y + bias.reshape(1, -1, 1, 1)
    return y * LIPSCHITZ


if __name__ == "__main__":
    key = jax.random.PRNGKey(0)
    kx, kw, kb = jax.random.split(key, 3)

    N, C, H, W = 2, 4, 16, 16
    x = jax.random.normal(kx, (N, C, H, W), dtype=jnp.float32)
    # Deterministic synthetic parameters (nn.Conv2d(C, C, 3, padding=1) shapes).
    fan_in = C * KH * KW
    w = jax.random.normal(kw, (C, C, KH, KW), dtype=jnp.float32) / jnp.sqrt(fan_in)
    b = jax.random.normal(kb, (C,), dtype=jnp.float32) * 0.1

    y = lipschitz_constrained_conv(x, w, b)
    jax.block_until_ready(y)

    y_ref = _reference(x, w, b)
    assert y.shape == (N, C, H, W)
    assert jnp.allclose(y, y_ref, atol=1e-4, rtol=1e-4), "mismatch vs reference"

    print("KERNEL_OK")
</pallas_src>

<mosaic_0001>
module attributes {stable_mosaic.version = 11 : i64} {
  func.func @_lipschitz_conv_kernel(%arg0: i32, %arg1: i32, %arg2: memref<1x8x450xf32, #tpu.memory_space<vmem>>, %arg3: memref<8x72xf32, #tpu.memory_space<vmem>>, %arg4: memref<8x1xf32, #tpu.memory_space<vmem>>, %arg5: memref<1x8x384xf32, #tpu.memory_space<vmem>>, %arg6: memref<72x384xf32, #tpu.memory_space<vmem>>) attributes {dimension_semantics = [#tpu.dimension_semantics<parallel>, #tpu.dimension_semantics<parallel>], iteration_bounds = array<i64: 2, 1>, scalar_prefetch = 0 : i64, scratch_operands = 1 : i64, tpu.core_type = #tpu.core_type<tc>, window_params = [{transform_indices = @transform_0, window_bounds = array<i64: 1, 8, 450>}, {transform_indices = @transform_1, window_bounds = array<i64: 8, 72>}, {transform_indices = @transform_2, window_bounds = array<i64: 8, 1>}, {transform_indices = @transform_3, window_bounds = array<i64: 1, 8, 384>}]} {
    %c0 = arith.constant 0 : index
    %c0_0 = arith.constant 0 : index
    %0 = vector.load %arg3[%c0, %c0_0] : memref<8x72xf32, #tpu.memory_space<vmem>>, vector<8x72xf32>
    %c0_1 = arith.constant 0 : index
    %c0_2 = arith.constant 0 : index
    %1 = vector.load %arg4[%c0_1, %c0_2] : memref<8x1xf32, #tpu.memory_space<vmem>>, vector<8x1xf32>
    %c0_3 = arith.constant 0 : index
    %c0_4 = arith.constant 0 : index
    %c17 = arith.constant 17 : index
    %2 = vector.load %arg2[%c0_3, %c0_4, %c17] : memref<1x8x450xf32, #tpu.memory_space<vmem>>, vector<1x8x384xf32>
    %3 = vector.shape_cast %2 : vector<1x8x384xf32> to vector<8x384xf32>
    %c0_5 = arith.constant 0 : index
    %c0_6 = arith.constant 0 : index
    %4 = vector.load %arg6[%c0_5, %c0_6] : memref<72x384xf32, #tpu.memory_space<vmem>>, vector<8x384xf32>
    tpu.vector_store %arg6[%c0_5, %c0_6], %3 {strides = array<i32>} : memref<72x384xf32, #tpu.memory_space<vmem>>, vector<8x384xf32>,
    %c0_7 = arith.constant 0 : index
    %c0_8 = arith.constant 0 : index
    %c18 = arith.constant 18 : index
    %5 = vector.load %arg2[%c0_7, %c0_8, %c18] : memref<1x8x450xf32, #tpu.memory_space<vmem>>, vector<1x8x384xf32>
    %6 = vector.shape_cast %5 : vector<1x8x384xf32> to vector<8x384xf32>
    %c8 = arith.constant 8 : index
    %c0_9 = arith.constant 0 : index
    %7 = vector.load %arg6[%c8, %c0_9] : memref<72x384xf32, #tpu.memory_space<vmem>>, vector<8x384xf32>
    tpu.vector_store %arg6[%c8, %c0_9], %6 {strides = array<i32>} : memref<72x384xf32, #tpu.memory_space<vmem>>, vector<8x384xf32>,
    %c0_10 = arith.constant 0 : index
    %c0_11 = arith.constant 0 : index
    %c19 = arith.constant 19 : index
    %8 = vector.load %arg2[%c0_10, %c0_11, %c19] : memref<1x8x450xf32, #tpu.memory_space<vmem>>, vector<1x8x384xf32>
    %9 = vector.shape_cast %8 : vector<1x8x384xf32> to vector<8x384xf32>
    %c16 = arith.constant 16 : index
    %c0_12 = arith.constant 0 : index
    %10 = vector.load %arg6[%c16, %c0_12] : memref<72x384xf32, #tpu.memory_space<vmem>>, vector<8x384xf32>
    tpu.vector_store %arg6[%c16, %c0_12], %9 {strides = array<i32>} : memref<72x384xf32, #tpu.memory_space<vmem>>, vector<8x384xf32>,
    %c0_13 = arith.constant 0 : index
    %c0_14 = arith.constant 0 : index
    %c35 = arith.constant 35 : index
    %11 = vector.load %arg2[%c0_13, %c0_14, %c35] : memref<1x8x450xf32, #tpu.memory_space<vmem>>, vector<1x8x384xf32>
    %12 = vector.shape_cast %11 : vector<1x8x384xf32> to vector<8x384xf32>
    %c24 = arith.constant 24 : index
    %c0_15 = arith.constant 0 : index
    %13 = vector.load %arg6[%c24, %c0_15] : memref<72x384xf32, #tpu.memory_space<vmem>>, vector<8x384xf32>
    tpu.vector_store %arg6[%c24, %c0_15], %12 {strides = array<i32>} : memref<72x384xf32, #tpu.memory_space<vmem>>, vector<8x384xf32>,
    %c0_16 = arith.constant 0 : index
    %c0_17 = arith.constant 0 : index
    %c36 = arith.constant 36 : index
    %14 = vector.load %arg2[%c0_16, %c0_17, %c36] : memref<1x8x450xf32, #tpu.memory_space<vmem>>, vector<1x8x384xf32>
    %15 = vector.shape_cast %14 : vector<1x8x384xf32> to vector<8x384xf32>
    %c32 = arith.constant 32 : index
    %c0_18 = arith.constant 0 : index
    %16 = vector.load %arg6[%c32, %c0_18] : memref<72x384xf32, #tpu.memory_space<vmem>>, vector<8x384xf32>
    tpu.vector_store %arg6[%c32, %c0_18], %15 {strides = array<i32>} : memref<72x384xf32, #tpu.memory_space<vmem>>, vector<8x384xf32>,
    %c0_19 = arith.constant 0 : index
    %c0_20 = arith.constant 0 : index
    %c37 = arith.constant 37 : index
    %17 = vector.load %arg2[%c0_19, %c0_20, %c37] : memref<1x8x450xf32, #tpu.memory_space<vmem>>, vector<1x8x384xf32>
    %18 = vector.shape_cast %17 : vector<1x8x384xf32> to vector<8x384xf32>
    %c40 = arith.constant 40 : index
    %c0_21 = arith.constant 0 : index
    %19 = vector.load %arg6[%c40, %c0_21] : memref<72x384xf32, #tpu.memory_space<vmem>>, vector<8x384xf32>
    tpu.vector_store %arg6[%c40, %c0_21], %18 {strides = array<i32>} : memref<72x384xf32, #tpu.memory_space<vmem>>, vector<8x384xf32>,
    %c0_22 = arith.constant 0 : index
    %c0_23 = arith.constant 0 : index
    %c53 = arith.constant 53 : index
    %20 = vector.load %arg2[%c0_22, %c0_23, %c53] : memref<1x8x450xf32, #tpu.memory_space<vmem>>, vector<1x8x384xf32>
    %21 = vector.shape_cast %20 : vector<1x8x384xf32> to vector<8x384xf32>
    %c48 = arith.constant 48 : index
    %c0_24 = arith.constant 0 : index
    %22 = vector.load %arg6[%c48, %c0_24] : memref<72x384xf32, #tpu.memory_space<vmem>>, vector<8x384xf32>
    tpu.vector_store %arg6[%c48, %c0_24], %21 {strides = array<i32>} : memref<72x384xf32, #tpu.memory_space<vmem>>, vector<8x384xf32>,
    %c0_25 = arith.constant 0 : index
    %c0_26 = arith.constant 0 : index
    %c54 = arith.constant 54 : index
    %23 = vector.load %arg2[%c0_25, %c0_26, %c54] : memref<1x8x450xf32, #tpu.memory_space<vmem>>, vector<1x8x384xf32>
    %24 = vector.shape_cast %23 : vector<1x8x384xf32> to vector<8x384xf32>
    %c56 = arith.constant 56 : index
    %c0_27 = arith.constant 0 : index
    %25 = vector.load %arg6[%c56, %c0_27] : memref<72x384xf32, #tpu.memory_space<vmem>>, vector<8x384xf32>
    tpu.vector_store %arg6[%c56, %c0_27], %24 {strides = array<i32>} : memref<72x384xf32, #tpu.memory_space<vmem>>, vector<8x384xf32>,
    %c0_28 = arith.constant 0 : index
    %c0_29 = arith.constant 0 : index
    %c55 = arith.constant 55 : index
    %26 = vector.load %arg2[%c0_28, %c0_29, %c55] : memref<1x8x450xf32, #tpu.memory_space<vmem>>, vector<1x8x384xf32>
    %27 = vector.shape_cast %26 : vector<1x8x384xf32> to vector<8x384xf32>
    %c64 = arith.constant 64 : index
    %c0_30 = arith.constant 0 : index
    %28 = vector.load %arg6[%c64, %c0_30] : memref<72x384xf32, #tpu.memory_space<vmem>>, vector<8x384xf32>
    tpu.vector_store %arg6[%c64, %c0_30], %27 {strides = array<i32>} : memref<72x384xf32, #tpu.memory_space<vmem>>, vector<8x384xf32>,
    %c0_31 = arith.constant 0 : index
    %c0_32 = arith.constant 0 : index
    %29 = vector.load %arg6[%c0_31, %c0_32] : memref<72x384xf32, #tpu.memory_space<vmem>>, vector<72x384xf32>
    %cst = arith.constant dense<0.000000e+00> : vector<8x384xf32>
    %30 = tpu.matmul %0, %29, %cst {dimension_numbers = #tpu.dot_dimension_numbers<[1], [0], [0], [1], [0, 0, 1, 1], [], []>} : vector<8x72xf32>, vector<72x384xf32>, vector<8x384xf32> -> vector<8x384xf32>
    %31 = vector.broadcast %1 : vector<8x1xf32> to vector<8x384xf32>
    %32 = arith.addf %30, %31 : vector<8x384xf32>
    %c0_33 = arith.constant 0 : index
    %c0_34 = arith.constant 0 : index
    %c0_35 = arith.constant 0 : index
    %33 = vector.load %arg5[%c0_33, %c0_34, %c0_35] : memref<1x8x384xf32, #tpu.memory_space<vmem>>, vector<1x8x384xf32>
    %34 = vector.shape_cast %33 : vector<1x8x384xf32> to vector<8x384xf32>
    %35 = vector.shape_cast %32 : vector<8x384xf32> to vector<1x8x384xf32>
    tpu.vector_store %arg5[%c0_33, %c0_34, %c0_35], %35 {strides = array<i32>} : memref<1x8x384xf32, #tpu.memory_space<vmem>>, vector<1x8x384xf32>,
    return
  }
  func.func @transform_0(%arg0: i32, %arg1: i32) -> (i32, i32, i32) {
    %c0_i32 = arith.constant 0 : i32
    %c0_i32_0 = arith.constant 0 : i32
    %c0_i32_1 = arith.constant 0 : i32
    return %arg0, %c0_i32, %c0_i32_0 : i32, i32, i32
  }
  func.func @transform_1(%arg0: i32, %arg1: i32) -> (i32, i32) {
    %c0_i32 = arith.constant 0 : i32
    %c0_i32_0 = arith.constant 0 : i32
    return %arg1, %c0_i32 : i32, i32
  }
  func.func @transform_2(%arg0: i32, %arg1: i32) -> (i32, i32) {
    %c0_i32 = arith.constant 0 : i32
    %c0_i32_0 = arith.constant 0 : i32
    return %arg1, %c0_i32 : i32, i32
  }
  func.func @transform_3(%arg0: i32, %arg1: i32) -> (i32, i32, i32) {
    %c0_i32 = arith.constant 0 : i32
    %c0_i32_0 = arith.constant 0 : i32
    return %arg0, %arg1, %c0_i32 : i32, i32, i32
  }
}

</mosaic_0001>

<llo_original>
// kernel: tpu_custom_call.1
$region0: #{tpu_custom_call.1}
  #allocation0 [shape = 'u32[]', space=smem, size = 0x4, offset = 0x4, fixed_abs, tag = 'smem constant byte address 0x4 - core index']
  #allocation1 [shape = 'u32[144,128]{1,0:T(1,128)}', space=vmem, size = 0x12000, scoped, tag = 'internal scratch']
  #allocation2 [shape = 'f32[72,384]{1,0:T(8,128)}', space=vmem, size = 0x1b000, scoped, tag = 'scratch operand']
  %s0 = inlined_call_operand.hbm [shape: f32[2,8,450], index: 0, kind: input, shape index: {}]
  %s1 = inlined_call_operand.vmem [shape: f32[8,72], index: 1, kind: input, shape index: {}]
  %s2 = inlined_call_operand.vmem [shape: f32[8,1], index: 2, kind: input, shape index: {}]
  %s3 = inlined_call_operand.hbm [shape: f32[2,8,384], index: 3, kind: output, shape index: {}]
  %s4 = sld [smem:[#allocation0]]
  $region49: #{tpu_custom_call.1} parent=0
    _
  %s6 = ssub.s32 1, %s4
  %s7 = scalar_select 0, %s6, %s4
  $region1: #{tpu_custom_call.1} parent=0
    #allocation3 [shape = 'u8[32768]{0}', space=vmem, size = 0x8000, scoped, tag = 'input window, operand 0']
    #allocation4 [shape = 's32[2]{0}', space=sflag, size = 0x8, scoped, tag = 'scoped memory for tpu_custom_call.1']
    #allocation5 [shape = 's32[2]{0}', space=sflag, size = 0x8, scoped, tag = 'scoped memory for tpu_custom_call.1']
    #allocation6 [shape = 'u8[24576]{0}', space=vmem, size = 0x6000, scoped, tag = 'output window, operand 0']
    %8 = vsyncpa [#allocation4], 0
    %s9 = scalar_lea.sflag [#allocation4], 1
    %10 = vsyncpa %s9, 0
    %11 = vsyncpa [#allocation5], 0
    %s12 = scalar_lea.sflag [#allocation5], 1
    %13 = vsyncpa %s12, 0
    loop: start=0, step=1, limit=4
    $region2: #{tpu_custom_call.1} parent=1 // loop_pre_header
      _
    $region3: #{tpu_custom_call.1} parent=1 // loop_header
      %s15 = sphi 0, %s19
      %p16 = scmp.ge.s32.totalorder %s15, 4
      %s22 = sphi 0, %s34
      %s23 = sphi 0, %s30
      %s24 = sphi 0, %s22
      %s25 = sphi 0, %s23
      %s26 = sphi 0, %s24
      %s27 = sphi 0, %s25
      %s37 = sphi 0, %s39
      %s40 = sphi 0, %s37
      %s41 = sphi 0, %s40
      %s57 = sphi 0, %s41
      %s63 = sphi 0, %s65
      %s66 = sphi 0, %s63
      %s67 = sphi 0, %s66
      %s83 = sphi 0, %s67
      %s89 = sphi 0, %s91
      %s92 = sphi 0, %s89
      %s93 = sphi 0, %s92
      %s109 = sphi 0, %s93
      %s117 = sphi 0, %s119
      %s120 = sphi 0, %s117
      %s121 = sphi 0, %s120
      %s137 = sphi 0, %s121
    $region4: #{tpu_custom_call.1} parent=1 // loop_header_branch
      %18 = sbr.rel (%p16) target = $region8
    $region5: #{tpu_custom_call.1} parent=1 // loop_body
      %s20 = ssub.s32 %s15, 1
      %s21 = ssub.s32 %s15, 2
      %s28 = sadd.s32 1, %s23
      %p29 = scmp.ge.s32.totalorder %s28, 1
      %s30 = scalar_select %p29, 0, %s28
      %s31 = sadd.s32 1, %s22
      %s32 = scalar_select %p29, %s31, %s22
      %p33 = scmp.ge.s32.totalorder %s32, 2
      %s34 = scalar_select %p33, 0, %s32
      %s35 = ssub.s32 %s22, %s34
      %p36 = scmp.eq.s32.totalorder %s35, 0
      %s38 = sadd.s32 %s37, 1
      %s39 = scalar_select %p36, %s37, %s38
      %p42 = pneg %p36
      %p43 = scmp.eq.s32.totalorder %s15, 1
      %p44 = por %p42, %p43
      %p45 = scmp.ne.s32.totalorder %s37, %s40
      %p46 = scmp.eq.s32.totalorder %s15, 0
      %p47 = por %p45, %p46
      %p48 = scmp.ne.s32.totalorder %s37, %s40
      %p49 = scmp.eq.s32.totalorder %s20, 1
      %p50 = por %p48, %p49
      %p51 = scmp.ne.s32.totalorder %s40, %s41
      %p52 = scmp.eq.s32.totalorder %s20, 0
      %p53 = por %p51, %p52
      %p54 = scmp.ne.s32.totalorder %s40, %s41
      %p55 = scmp.eq.s32.totalorder %s21, 1
      %p56 = por %p54, %p55
      %p58 = scmp.ne.s32.totalorder %s41, %s57
      %p59 = scmp.eq.s32.totalorder %s21, 0
      %p60 = por %p58, %p59
      %s61 = ssub.s32 %s23, %s30
      %p62 = scmp.eq.s32.totalorder %s61, 0
      %s64 = sadd.s32 %s63, 1
      %s65 = scalar_select %p62, %s63, %s64
      %p68 = pneg %p62
      %p69 = scmp.eq.s32.totalorder %s15, 1
      %p70 = por %p68, %p69
      %p71 = scmp.ne.s32.totalorder %s63, %s66
      %p72 = scmp.eq.s32.totalorder %s15, 0
      %p73 = por %p71, %p72
      %p74 = scmp.ne.s32.totalorder %s63, %s66
      %p75 = scmp.eq.s32.totalorder %s20, 1
      %p76 = por %p74, %p75
      %p77 = scmp.ne.s32.totalorder %s66, %s67
      %p78 = scmp.eq.s32.totalorder %s20, 0
      %p79 = por %p77, %p78
      %p80 = scmp.ne.s32.totalorder %s66, %s67
      %p81 = scmp.eq.s32.totalorder %s21, 1
      %p82 = por %p80, %p81
      %p84 = scmp.ne.s32.totalorder %s67, %s83
      %p85 = scmp.eq.s32.totalorder %s21, 0
      %p86 = por %p84, %p85
      %s87 = ssub.s32 %s23, %s30
      %p88 = scmp.eq.s32.totalorder %s87, 0
      %s90 = sadd.s32 %s89, 1
      %s91 = scalar_select %p88, %s89, %s90
      %p94 = pneg %p88
      %p95 = scmp.eq.s32.totalorder %s15, 1
      %p96 = por %p94, %p95
      %p97 = scmp.ne.s32.totalorder %s89, %s92
      %p98 = scmp.eq.s32.totalorder %s15, 0
      %p99 = por %p97, %p98
      %p100 = scmp.ne.s32.totalorder %s89, %s92
      %p101 = scmp.eq.s32.totalorder %s20, 1
      %p102 = por %p100, %p101
      %p103 = scmp.ne.s32.totalorder %s92, %s93
      %p104 = scmp.eq.s32.totalorder %s20, 0
      %p105 = por %p103, %p104
      %p106 = scmp.ne.s32.totalorder %s92, %s93
      %p107 = scmp.eq.s32.totalorder %s21, 1
      %p108 = por %p106, %p107
      %p110 = scmp.ne.s32.totalorder %s93, %s109
      %p111 = scmp.eq.s32.totalorder %s21, 0
      %p112 = por %p110, %p111
      %s113 = ssub.s32 %s22, %s34
      %s114 = ssub.s32 %s23, %s30
      %s115 = sor.u32 %s113, %s114
      %p116 = scmp.eq.s32.totalorder %s115, 0
      %s118 = sadd.s32 %s117, 1
      %s119 = scalar_select %p116, %s117, %s118
      %p122 = pneg %p116
      %p123 = scmp.eq.s32.totalorder %s15, 1
      %p124 = por %p122, %p123
      %p125 = scmp.ne.s32.totalorder %s117, %s120
      %p126 = scmp.eq.s32.totalorder %s15, 0
      %p127 = por %p125, %p126
      %p128 = scmp.ne.s32.totalorder %s117, %s120
      %p129 = scmp.eq.s32.totalorder %s20, 1
      %p130 = por %p128, %p129
      %p131 = scmp.ne.s32.totalorder %s120, %s121
      %p132 = scmp.eq.s32.totalorder %s20, 0
      %p133 = por %p131, %p132
      %p134 = scmp.ne.s32.totalorder %s120, %s121
      %p135 = scmp.eq.s32.totalorder %s21, 1
      %p136 = por %p134, %p135
      %p138 = scmp.ne.s32.totalorder %s121, %s137
      %p139 = scmp.eq.s32.totalorder %s21, 0
      %p140 = por %p138, %p139
      %p141 = scmp.le.s32.totalorder 1, %s15
      %p142 = scmp.lt.s32.totalorder %s15, 3
      %p143 = pnand %p141, %p142
      %p144 = pneg %p143
      // Predicated region
      $region9: #{tpu_custom_call.1} parent=5 // pred_check
        _
      $region10: #{tpu_custom_call.1} parent=5 // pred_check_branch
        %146 = sbr.rel (%p143) target = $region12
      $region11: #{tpu_custom_call.1} parent=5 // pred_region
        %s147 = ssub.s32 %s15, 1
        // Predicated region
        $region13: #{tpu_custom_call.1} parent=11 // pred_check
          %p148 = pneg %p79
        $region14: #{tpu_custom_call.1} parent=11 // pred_check_branch
          %150 = sbr.rel (%p148) target = $region16
        $region15: #{tpu_custom_call.1} parent=11 // pred_region
          %p151 = scmp.lt.s32.totalorder %s25, 0
          %s152 = scalar_select %p151, %s25, 0
          %s153 = smul.addr %s152, 8
          %s154 = scalar_lea.vmem %s1, %s153
        $region16: #{tpu_custom_call.1} parent=11 // pred_fallthru
          _
        // Predicated region
        $region17: #{tpu_custom_call.1} parent=11 // pred_check
          %p155 = pneg %p105
        $region18: #{tpu_custom_call.1} parent=11 // pred_check_branch
          %157 = sbr.rel (%p155) target = $region20
        $region19: #{tpu_custom_call.1} parent=11 // pred_region
          %p158 = scmp.lt.s32.totalorder %s25, 0
          %s159 = scalar_select %p158, %s25, 0
          %s160 = smul.addr %s159, 8
          %s161 = scalar_lea.vmem %s2, %s160
        $region20: #{tpu_custom_call.1} parent=11 // pred_fallthru
          _
      $region12: #{tpu_custom_call.1} parent=5 // pred_fallthru
        _
      %p162 = scmp.lt.s32.totalorder %s15, 2
      // Predicated region
      $region21: #{tpu_custom_call.1} parent=5 // pred_check
        %p163 = pneg %p162
      $region22: #{tpu_custom_call.1} parent=5 // pred_check_branch
        %165 = sbr.rel (%p163) target = $region24
      $region23: #{tpu_custom_call.1} parent=5 // pred_region
        // Predicated region
        $region25: #{tpu_custom_call.1} parent=23 // pred_check
          %p166 = pneg %p47
        $region26: #{tpu_custom_call.1} parent=23 // pred_check_branch
          %168 = sbr.rel (%p166) target = $region28
        $region27: #{tpu_custom_call.1} parent=23 // pred_region
          %s169 = sand.u32 %s37, 1
          %s170 = scalar_lea.sflag [#allocation4], %s169
          %s171 = sand.u32 %s37, 1
          %s172 = smul.addr %s171, 32
          %s173 = scalar_lea.vmem [#allocation3], %s172
          %s175 = ssub.s32 512, 512
          %176 = vsyncadd %s170, %s175
          %s177 = smul.addr %s22, 4
          %s178 = smul.addr %s177, 128
          %s179 = scalar_lea.hbm %s0, %s178
          %s181 = sshll.u32 %s173, 4
          %s182 = int_to_ptr.vmem [resolvable:$true] %s181
          %184 = dma.hbm_to_vmem [thread:$0]  %s179, 512, %s182, %s170
        $region28: #{tpu_custom_call.1} parent=23 // pred_fallthru
          _
      $region24: #{tpu_custom_call.1} parent=5 // pred_fallthru
        _
      %p185 = scmp.le.s32.totalorder 1, %s15
      %p186 = scmp.lt.s32.totalorder %s15, 3
      %p187 = pnand %p185, %p186
      %p188 = pneg %p187
      // Predicated region
      $region29: #{tpu_custom_call.1} parent=5 // pred_check
        _
      $region30: #{tpu_custom_call.1} parent=5 // pred_check_branch
        %190 = sbr.rel (%p187) target = $region32
      $region31: #{tpu_custom_call.1} parent=5 // pred_region
        %s191 = ssub.s32 %s15, 1
        %s192 = sand.u32 %s40, 1
        %s193 = scalar_lea.sflag [#allocation4], %s192
        %s194 = sand.u32 %s40, 1
        %s195 = smul.addr %s194, 32
        %s196 = scalar_lea.vmem [#allocation3], %s195
        // Predicated region
        $region33: #{tpu_custom_call.1} parent=31 // pred_check
          %p197 = pneg %p53
        $region34: #{tpu_custom_call.1} parent=31 // pred_check_branch
          %199 = sbr.rel (%p197) target = $region36
        $region35: #{tpu_custom_call.1} parent=31 // pred_region
          %200 = dma.done %s193, 512
        $region36: #{tpu_custom_call.1} parent=31 // pred_fallthru
          _
        %s201 = sand.u32 %s40, 1
        %s202 = scalar_lea.sflag [#allocation4], %s201
        %s203 = sand.u32 %s40, 1
        %s204 = smul.addr %s203, 32
        %s205 = scalar_lea.vmem [#allocation3], %s204
        %p206 = pneg %p53
        %p207 = pneg %p50
        %p208 = scmp.lt.s32.totalorder %s25, 0
        %s209 = scalar_select %p208, %s25, 0
        %s210 = smul.addr %s209, 8
        %s211 = scalar_lea.vmem %s1, %s210
        %p212 = pneg %p79
        %p213 = pneg %p76
        %p214 = scmp.lt.s32.totalorder %s25, 0
        %s215 = scalar_select %p214, %s25, 0
        %s216 = smul.addr %s215, 8
        %s217 = scalar_lea.vmem %s2, %s216
        %p218 = pneg %p105
        %p219 = pneg %p102
        %p220 = pneg %p133
        %p221 = pneg %p130
        %s222 = sand.u32 %s120, 1
        %s223 = scalar_lea.sflag [#allocation5], %s222
        %s224 = sand.u32 %s120, 1
        %s225 = smul.addr %s224, 24
        %s226 = scalar_lea.vmem [#allocation6], %s225
        %p227 = scmp.lt.s32.totalorder %s25, 0
        %s228 = scalar_select %p227, %s25, 0
        %s229 = smul.addr %s228, 8
        %s230 = scalar_lea.vmem %s1, %s229
        %p231 = scmp.lt.s32.totalorder %s25, 0
        %s232 = scalar_select %p231, %s25, 0
        %s233 = smul.addr %s232, 8
        %s234 = scalar_lea.vmem %s2, %s233
        %v235 = vld [vmem:[%s230] sm:$0xff]
        %v236 = vld [vmem:[%s234] sm:$0xff]
        %v237 = vld [vmem:[%s196] sm:$0xff]
        %v238 = vld [vmem:[%s196 + $0x8] sm:$0xff]
        %v239 = vld [vmem:[%s196 + $0x10] sm:$0xff]
        %v240 = vld [vmem:[%s196 + $0x18] sm:$0xff]
        %245 = vrot.lane.b32.xlu0 %v237, 111
        %v246 = vpop.permute.xlu0 %245
        %247 = vrot.lane.b32.xlu0 %v238, 111
        %v248 = vpop.permute.xlu0 %247
        %249 = vrot.lane.b32.xlu0 %v239, 111
        %v250 = vpop.permute.xlu0 %249
        %251 = vrot.lane.b32.xlu0 %v240, 111
        %v252 = vpop.permute.xlu0 %251
        %vm253 = vcmask 908288
        %v254 = vsel %vm253, %v246, %v248
        %v255 = vsel %vm253, %v248, %v250
        %v256 = vsel %vm253, %v250, %v252
        %260 = vst [vmem:[#allocation2] sm:$0xff] %v254
        %261 = vst [vmem:[#allocation2 + $0x8] sm:$0xff] %v255
        %262 = vst [vmem:[#allocation2 + $0x10] sm:$0xff] %v256
        %v263 = vld [vmem:[%s196] sm:$0xff]
        %v264 = vld [vmem:[%s196 + $0x8] sm:$0xff]
        %v265 = vld [vmem:[%s196 + $0x10] sm:$0xff]
        %v266 = vld [vmem:[%s196 + $0x18] sm:$0xff]
        %271 = vrot.lane.b32.xlu0 %v263, 110
        %v272 = vpop.permute.xlu0 %271
        %273 = vrot.lane.b32.xlu0 %v264, 110
        %v274 = vpop.permute.xlu0 %273
        %275 = vrot.lane.b32.xlu0 %v265, 110
        %v276 = vpop.permute.xlu0 %275
        %277 = vrot.lane.b32.xlu0 %v266, 110
        %v278 = vpop.permute.xlu0 %277
        %vm279 = vcmask 900096
        %v280 = vsel %vm279, %v272, %v274
        %v281 = vsel %vm279, %v274, %v276
        %v282 = vsel %vm279, %v276, %v278
        %286 = vst [vmem:[#allocation2 + $0x18] sm:$0xff] %v280
        %287 = vst [vmem:[#allocation2 + $0x20] sm:$0xff] %v281
        %288 = vst [vmem:[#allocation2 + $0x28] sm:$0xff] %v282
        %v289 = vld [vmem:[%s196] sm:$0xff]
        %v290 = vld [vmem:[%s196 + $0x8] sm:$0xff]
        %v291 = vld [vmem:[%s196 + $0x10] sm:$0xff]
        %v292 = vld [vmem:[%s196 + $0x18] sm:$0xff]
        %297 = vrot.lane.b32.xlu0 %v289, 109
        %v298 = vpop.permute.xlu0 %297
        %299 = vrot.lane.b32.xlu0 %v290, 109
        %v300 = vpop.permute.xlu0 %299
        %301 = vrot.lane.b32.xlu0 %v291, 109
        %v302 = vpop.permute.xlu0 %301
        %303 = vrot.lane.b32.xlu0 %v292, 109
        %v304 = vpop.permute.xlu0 %303
        %vm305 = vcmask 891904
        %v306 = vsel %vm305, %v298, %v300
        %v307 = vsel %vm305, %v300, %v302
        %v308 = vsel %vm305, %v302, %v304
        %312 = vst [vmem:[#allocation2 + $0x30] sm:$0xff] %v306
        %313 = vst [vmem:[#allocation2 + $0x38] sm:$0xff] %v307
        %314 = vst [vmem:[#allocation2 + $0x40] sm:$0xff] %v308
        %v315 = vld [vmem:[%s196] sm:$0xff]
        %v316 = vld [vmem:[%s196 + $0x8] sm:$0xff]
        %v317 = vld [vmem:[%s196 + $0x10] sm:$0xff]
        %v318 = vld [vmem:[%s196 + $0x18] sm:$0xff]
        %323 = vrot.lane.b32.xlu0 %v315, 93
        %v324 = vpop.permute.xlu0 %323
        %325 = vrot.lane.b32.xlu0 %v316, 93
        %v326 = vpop.permute.xlu0 %325
        %327 = vrot.lane.b32.xlu0 %v317, 93
        %v328 = vpop.permute.xlu0 %327
        %329 = vrot.lane.b32.xlu0 %v318, 93
        %v330 = vpop.permute.xlu0 %329
        %vm331 = vcmask 760832
        %v332 = vsel %vm331, %v324, %v326
        %v333 = vsel %vm331, %v326, %v328
        %v334 = vsel %vm331, %v328, %v330
        %338 = vst [vmem:[#allocation2 + $0x48] sm:$0xff] %v332
        %339 = vst [vmem:[#allocation2 + $0x50] sm:$0xff] %v333
        %340 = vst [vmem:[#allocation2 + $0x58] sm:$0xff] %v334
        %v341 = vld [vmem:[%s196] sm:$0xff]
        %v342 = vld [vmem:[%s196 + $0x8] sm:$0xff]
        %v343 = vld [vmem:[%s196 + $0x10] sm:$0xff]
        %v344 = vld [vmem:[%s196 + $0x18] sm:$0xff]
        %349 = vrot.lane.b32.xlu0 %v341, 92
        %v350 = vpop.permute.xlu0 %349
        %351 = vrot.lane.b32.xlu0 %v342, 92
        %v352 = vpop.permute.xlu0 %351
        %353 = vrot.lane.b32.xlu0 %v343, 92
        %v354 = vpop.permute.xlu0 %353
        %355 = vrot.lane.b32.xlu0 %v344, 92
        %v356 = vpop.permute.xlu0 %355
        %vm357 = vcmask 752640
        %v358 = vsel %vm357, %v350, %v352
        %v359 = vsel %vm357, %v352, %v354
        %v360 = vsel %vm357, %v354, %v356
        %364 = vst [vmem:[#allocation2 + $0x60] sm:$0xff] %v358
        %365 = vst [vmem:[#allocation2 + $0x68] sm:$0xff] %v359
        %366 = vst [vmem:[#allocation2 + $0x70] sm:$0xff] %v360
        %v367 = vld [vmem:[%s196] sm:$0xff]
        %v368 = vld [vmem:[%s196 + $0x8] sm:$0xff]
        %v369 = vld [vmem:[%s196 + $0x10] sm:$0xff]
        %v370 = vld [vmem:[%s196 + $0x18] sm:$0xff]
        %375 = vrot.lane.b32.xlu0 %v367, 91
        %v376 = vpop.permute.xlu0 %375
        %377 = vrot.lane.b32.xlu0 %v368, 91
        %v378 = vpop.permute.xlu0 %377
        %379 = vrot.lane.b32.xlu0 %v369, 91
        %v380 = vpop.permute.xlu0 %379
        %381 = vrot.lane.b32.xlu0 %v370, 91
        %v382 = vpop.permute.xlu0 %381
        %vm383 = vcmask 744448
        %v384 = vsel %vm383, %v376, %v378
        %v385 = vsel %vm383, %v378, %v380
        %v386 = vsel %vm383, %v380, %v382
        %390 = vst [vmem:[#allocation2 + $0x78] sm:$0xff] %v384
        %391 = vst [vmem:[#allocation2 + $0x80] sm:$0xff] %v385
        %392 = vst [vmem:[#allocation2 + $0x88] sm:$0xff] %v386
        %v393 = vld [vmem:[%s196] sm:$0xff]
        %v394 = vld [vmem:[%s196 + $0x8] sm:$0xff]
        %v395 = vld [vmem:[%s196 + $0x10] sm:$0xff]
        %v396 = vld [vmem:[%s196 + $0x18] sm:$0xff]
        %401 = vrot.lane.b32.xlu0 %v393, 75
        %v402 = vpop.permute.xlu0 %401
        %403 = vrot.lane.b32.xlu0 %v394, 75
        %v404 = vpop.permute.xlu0 %403
        %405 = vrot.lane.b32.xlu0 %v395, 75
        %v406 = vpop.permute.xlu0 %405
        %407 = vrot.lane.b32.xlu0 %v396, 75
        %v408 = vpop.permute.xlu0 %407
        %vm409 = vcmask 613376
        %v410 = vsel %vm409, %v402, %v404
        %v411 = vsel %vm409, %v404, %v406
        %v412 = vsel %vm409, %v406, %v408
        %416 = vst [vmem:[#allocation2 + $0x90] sm:$0xff] %v410
        %417 = vst [vmem:[#allocation2 + $0x98] sm:$0xff] %v411
        %418 = vst [vmem:[#allocation2 + $0xa0] sm:$0xff] %v412
        %v419 = vld [vmem:[%s196] sm:$0xff]
        %v420 = vld [vmem:[%s196 + $0x8] sm:$0xff]
        %v421 = vld [vmem:[%s196 + $0x10] sm:$0xff]
        %v422 = vld [vmem:[%s196 + $0x18] sm:$0xff]
        %427 = vrot.lane.b32.xlu0 %v419, 74
        %v428 = vpop.permute.xlu0 %427
        %429 = vrot.lane.b32.xlu0 %v420, 74
        %v430 = vpop.permute.xlu0 %429
        %431 = vrot.lane.b32.xlu0 %v421, 74
        %v432 = vpop.permute.xlu0 %431
        %433 = vrot.lane.b32.xlu0 %v422, 74
        %v434 = vpop.permute.xlu0 %433
        %vm435 = vcmask 605184
        %v436 = vsel %vm435, %v428, %v430
        %v437 = vsel %vm435, %v430, %v432
        %v438 = vsel %vm435, %v432, %v434
        %442 = vst [vmem:[#allocation2 + $0xa8] sm:$0xff] %v436
        %443 = vst [vmem:[#allocation2 + $0xb0] sm:$0xff] %v437
        %444 = vst [vmem:[#allocation2 + $0xb8] sm:$0xff] %v438
        %v445 = vld [vmem:[%s196] sm:$0xff]
        %v446 = vld [vmem:[%s196 + $0x8] sm:$0xff]
        %v447 = vld [vmem:[%s196 + $0x10] sm:$0xff]
        %v448 = vld [vmem:[%s196 + $0x18] sm:$0xff]
        %453 = vrot.lane.b32.xlu0 %v445, 73
        %v454 = vpop.permute.xlu0 %453
        %455 = vrot.lane.b32.xlu0 %v446, 73
        %v456 = vpop.permute.xlu0 %455
        %457 = vrot.lane.b32.xlu0 %v447, 73
        %v458 = vpop.permute.xlu0 %457
        %459 = vrot.lane.b32.xlu0 %v448, 73
        %v460 = vpop.permute.xlu0 %459
        %vm461 = vcmask 596992
        %v462 = vsel %vm461, %v454, %v456
        %v463 = vsel %vm461, %v456, %v458
        %v464 = vsel %vm461, %v458, %v460
        %468 = vst [vmem:[#allocation2 + $0xc0] sm:$0xff] %v462
        %469 = vst [vmem:[#allocation2 + $0xc8] sm:$0xff] %v463
        %470 = vst [vmem:[#allocation2 + $0xd0] sm:$0xff] %v464
        %v471 = vld [vmem:[#allocation2] sm:$0xff]
        %v472 = vld [vmem:[#allocation2 + $0x8] sm:$0xff]
        %v473 = vld [vmem:[#allocation2 + $0x10] sm:$0xff]
        %v474 = vld [vmem:[#allocation2 + $0x18] sm:$0xff]
        %v475 = vld [vmem:[#allocation2 + $0x20] sm:$0xff]
        %v476 = vld [vmem:[#allocation2 + $0x28] sm:$0xff]
        %v477 = vld [vmem:[#allocation2 + $0x30] sm:$0xff]
        %v478 = vld [vmem:[#allocation2 + $0x38] sm:$0xff]
        %v479 = vld [vmem:[#allocation2 + $0x40] sm:$0xff]
        %v480 = vld [vmem:[#allocation2 + $0x48] sm:$0xff]
        %v481 = vld [vmem:[#allocation2 + $0x50] sm:$0xff]
        %v482 = vld [vmem:[#allocation2 + $0x58] sm:$0xff]
        %v483 = vld [vmem:[#allocation2 + $0x60] sm:$0xff]
        %v484 = vld [vmem:[#allocation2 + $0x68] sm:$0xff]
        %v485 = vld [vmem:[#allocation2 + $0x70] sm:$0xff]
        %v486 = vld [vmem:[#allocation2 + $0x78] sm:$0xff]
        %v487 = vld [vmem:[#allocation2 + $0x80] sm:$0xff]
        %v488 = vld [vmem:[#allocation2 + $0x88] sm:$0xff]
        %v489 = vld [vmem:[#allocation2 + $0x90] sm:$0xff]
        %v490 = vld [vmem:[#allocation2 + $0x98] sm:$0xff]
        %v491 = vld [vmem:[#allocation2 + $0xa0] sm:$0xff]
        %v492 = vld [vmem:[#allocation2 + $0xa8] sm:$0xff]
        %v493 = vld [vmem:[#allocation2 + $0xb0] sm:$0xff]
        %v494 = vld [vmem:[#allocation2 + $0xb8] sm:$0xff]
        %v495 = vld [vmem:[#allocation2 + $0xc0] sm:$0xff]
        %v496 = vld [vmem:[#allocation2 + $0xc8] sm:$0xff]
        %v497 = vld [vmem:[#allocation2 + $0xd0] sm:$0xff]
        %499 = vset.pattern.permute.xlu0 0
        %500 = vperm.xlu0 %499, %v236
        %v501 = vpop.permute.xlu0 %500
        %vm503 = vcmask 588800
        %v505 = vsel %vm503, %v235, 0
        %507 = vmatprep.subr.mxu0 0.0
        %508 = vmatpush1.msra.mxu0 0.0
        %509 = vmatprep.subr.mxu0 0.0
        %510 = vmatpush1.msra.mxu0 0.0
        %511 = vmatprep.subr.mxu0 0.0
        %512 = vmatpush1.msra.mxu0 0.0
        %513 = vmatprep.subr.mxu0 0.0
        %514 = vmatpush1.msra.mxu0 0.0
        %515 = vmatprep.subr.mxu0 0.0
        %516 = vmatpush1.msra.mxu0 0.0
        %517 = vmatprep.subr.mxu0 0.0
        %518 = vmatpush1.msra.mxu0 0.0
        %519 = vmatprep.subr.mxu0 0.0
        %520 = vmatpush1.msra.mxu0 0.0
        %521 = vmatprep.subr.mxu0 %v496
        %522 = vmatpush1.msra.mxu0 %v495
        %523 = vmatprep.subr.mxu0 %v493
        %524 = vmatpush1.msra.mxu0 %v492
        %525 = vmatprep.subr.mxu0 %v490
        %526 = vmatpush1.msra.mxu0 %v489
        %527 = vmatprep.subr.mxu0 %v487
        %528 = vmatpush1.msra.mxu0 %v486
        %529 = vmatprep.subr.mxu0 %v484
        %530 = vmatpush1.msra.mxu0 %v483
        %531 = vmatprep.subr.mxu0 %v481
        %532 = vmatpush1.msra.mxu0 %v480
        %533 = vmatprep.subr.mxu0 %v478
        %534 = vmatpush1.msra.mxu0 %v477
        %535 = vmatprep.subr.mxu0 %v475
        %536 = vmatpush1.msra.mxu0 %v474
        %537 = vmatprep.subr.mxu0 %v472
        %538 = vmatpush1.msra.mxu0 %v471
        %539 = vmatprep.subr.mxu0 0.0
        %540 = vmatpush2.msra.mxu0 0.0
        %541 = vmatprep.subr.mxu0 0.0
        %542 = vmatpush2.msra.mxu0 0.0
        %543 = vmatprep.subr.mxu0 0.0
        %544 = vmatpush2.msra.mxu0 0.0
        %545 = vmatprep.subr.mxu0 0.0
        %546 = vmatpush2.msra.mxu0 0.0
        %547 = vmatprep.subr.mxu0 0.0
        %548 = vmatpush2.msra.mxu0 0.0
        %549 = vmatprep.subr.mxu0 0.0
        %550 = vmatpush2.msra.mxu0 0.0
        %551 = vmatprep.subr.mxu0 0.0
        %552 = vmatpush2.msra.mxu0 0.0
        %553 = vmatprep.subr.mxu0 0.0
        %554 = vmatpush2.msra.mxu0 0.0
        %555 = vmatprep.subr.mxu0 0.0
        %556 = vmatpush2.msra.mxu0 0.0
        %557 = vmatprep.subr.mxu0 0.0
        %558 = vmatpush2.msra.mxu0 0.0
        %559 = vmatprep.subr.mxu0 0.0
        %560 = vmatpush2.msra.mxu0 0.0
        %561 = vmatprep.subr.mxu0 0.0
        %562 = vmatpush2.msra.mxu0 0.0
        %563 = vmatprep.subr.mxu0 0.0
        %564 = vmatpush2.msra.mxu0 0.0
        %565 = vmatprep.subr.mxu0 0.0
        %566 = vmatpush2.msra.mxu0 0.0
        %567 = vmatprep.subr.mxu0 0.0
        %568 = vmatpush2.msra.mxu0 0.0
        %569 = vmatprep.subr.mxu0 0.0
        %570 = vmatpush2.msra.mxu0 0.0
        %571 = vmatprep.mubr.f32.mxu0 0.0
        %572 = vmatmul.mubr.f32.gmra.mxu0 %v505
        %v573 = vpop.f32.mrf.mxu0
        %v574 = vadd.f32 %v501, %v573
        %v575 = vpop.f32.mrf.mxu0
        %v576 = vadd.f32 %v501, %v575
        %577 = vdwg.mxu0
        %578 = vmatprep.subr.mxu0 0.0
        %579 = vmatpush1.msra.mxu0 0.0
        %580 = vmatprep.subr.mxu0 0.0
        %581 = vmatpush1.msra.mxu0 0.0
        %582 = vmatprep.subr.mxu0 0.0
        %583 = vmatpush1.msra.mxu0 0.0
        %584 = vmatprep.subr.mxu0 0.0
        %585 = vmatpush1.msra.mxu0 0.0
        %586 = vmatprep.subr.mxu0 0.0
        %587 = vmatpush1.msra.mxu0 0.0
        %588 = vmatprep.subr.mxu0 0.0
        %589 = vmatpush1.msra.mxu0 0.0
        %590 = vmatprep.subr.mxu0 0.0
        %591 = vmatpush1.msra.mxu0 0.0
        %592 = vmatprep.subr.mxu0 0.0
        %593 = vmatpush1.msra.mxu0 %v497
        %594 = vmatprep.subr.mxu0 0.0
        %595 = vmatpush1.msra.mxu0 %v494
        %596 = vmatprep.subr.mxu0 0.0
        %597 = vmatpush1.msra.mxu0 %v491
        %598 = vmatprep.subr.mxu0 0.0
        %599 = vmatpush1.msra.mxu0 %v488
        %600 = vmatprep.subr.mxu0 0.0
        %601 = vmatpush1.msra.mxu0 %v485
        %602 = vmatprep.subr.mxu0 0.0
        %603 = vmatpush1.msra.mxu0 %v482
        %604 = vmatprep.subr.mxu0 0.0
        %605 = vmatpush1.msra.mxu0 %v479
        %606 = vmatprep.subr.mxu0 0.0
        %607 = vmatpush1.msra.mxu0 %v476
        %608 = vmatprep.subr.mxu0 0.0
        %609 = vmatpush1.msra.mxu0 %v473
        %610 = vmatprep.subr.mxu0 0.0
        %611 = vmatpush2.msra.mxu0 0.0
        %612 = vmatprep.subr.mxu0 0.0
        %613 = vmatpush2.msra.mxu0 0.0
        %614 = vmatprep.subr.mxu0 0.0
        %615 = vmatpush2.msra.mxu0 0.0
        %616 = vmatprep.subr.mxu0 0.0
        %617 = vmatpush2.msra.mxu0 0.0
        %618 = vmatprep.subr.mxu0 0.0
        %619 = vmatpush2.msra.mxu0 0.0
        %620 = vmatprep.subr.mxu0 0.0
        %621 = vmatpush2.msra.mxu0 0.0
        %622 = vmatprep.subr.mxu0 0.0
        %623 = vmatpush2.msra.mxu0 0.0
        %624 = vmatprep.subr.mxu0 0.0
        %625 = vmatpush2.msra.mxu0 0.0
        %626 = vmatprep.subr.mxu0 0.0
        %627 = vmatpush2.msra.mxu0 0.0
        %628 = vmatprep.subr.mxu0 0.0
        %629 = vmatpush2.msra.mxu0 0.0
        %630 = vmatprep.subr.mxu0 0.0
        %631 = vmatpush2.msra.mxu0 0.0
        %632 = vmatprep.subr.mxu0 0.0
        %633 = vmatpush2.msra.mxu0 0.0
        %634 = vmatprep.subr.mxu0 0.0
        %635 = vmatpush2.msra.mxu0 0.0
        %636 = vmatprep.subr.mxu0 0.0
        %637 = vmatpush2.msra.mxu0 0.0
        %638 = vmatprep.subr.mxu0 0.0
        %639 = vmatpush2.msra.mxu0 0.0
        %640 = vmatprep.subr.mxu0 0.0
        %641 = vmatpush2.msra.mxu0 0.0
        %642 = vmatprep.mubr.f32.mxu0 0.0
        %643 = vmatmul.mubr.f32.gmra.mxu0 %v505
        %v644 = vpop.f32.mrf.mxu0
        %v645 = vadd.f32 %v501, %v644
        %v646 = vpop.f32.mrf.mxu0
        %647 = vdwg.mxu0
        %648 = vst [vmem:[%s226] sm:$0xff] %v574
        %649 = vst [vmem:[%s226 + $0x8] sm:$0xff] %v576
        %650 = vst [vmem:[%s226 + $0x10] sm:$0xff] %v645
        %s651 = sand.u32 %s120, 1
        %s652 = scalar_lea.sflag [#allocation5], %s651
        %s653 = sand.u32 %s120, 1
        %s654 = smul.addr %s653, 24
        %s655 = scalar_lea.vmem [#allocation6], %s654
        // Predicated region
        $region37: #{tpu_custom_call.1} parent=31 // pred_check
          %p656 = pneg %p130
        $region38: #{tpu_custom_call.1} parent=31 // pred_check_branch
          %658 = sbr.rel (%p656) target = $region40
        $region39: #{tpu_custom_call.1} parent=31 // pred_region
          %s660 = ssub.s32 384, 384
          %661 = vsyncadd %s652, %s660
          %s662 = smul.addr %s25, 3
          %s663 = smul.addr %s24, 3
          %s664 = sadd.s32 %s662, %s663
          %s665 = smul.addr %s664, 128
          %s666 = scalar_lea.hbm %s3, %s665
          %s668 = sshll.u32 %s655, 4
          %s669 = int_to_ptr.vmem [resolvable:$true] %s668
          %671 = dma.vmem_to_hbm [thread:$0]  %s669, 384, %s666, %s652
        $region40: #{tpu_custom_call.1} parent=31 // pred_fallthru
          _
      $region32: #{tpu_custom_call.1} parent=5 // pred_fallthru
        _
      %p672 = scmp.le.s32.totalorder 2, %s15
      // Predicated region
      $region41: #{tpu_custom_call.1} parent=5 // pred_check
        %p673 = pneg %p672
      $region42: #{tpu_custom_call.1} parent=5 // pred_check_branch
        %675 = sbr.rel (%p673) target = $region44
      $region43: #{tpu_custom_call.1} parent=5 // pred_region
        %s676 = ssub.s32 %s15, 2
        // Predicated region
        $region45: #{tpu_custom_call.1} parent=43 // pred_check
          %p677 = pneg %p136
        $region46: #{tpu_custom_call.1} parent=43 // pred_check_branch
          %679 = sbr.rel (%p677) target = $region48
        $region47: #{tpu_custom_call.1} parent=43 // pred_region
          %s680 = sand.u32 %s121, 1
          %s681 = scalar_lea.sflag [#allocation5], %s680
          %s682 = sand.u32 %s121, 1
          %s683 = smul.addr %s682, 24
          %s684 = scalar_lea.vmem [#allocation6], %s683
          %685 = dma.done %s681, 384
        $region48: #{tpu_custom_call.1} parent=43 // pred_fallthru
          _
      $region44: #{tpu_custom_call.1} parent=5 // pred_fallthru
        _
    $region6: #{tpu_custom_call.1} parent=1 // loop_footer
      %s19 = sadd.s32 1, %s15
    $region7: #{tpu_custom_call.1} parent=1 // loop_footer_branch
      %14 = sbr.rel target = $region3
    $region8: #{tpu_custom_call.1} parent=1 // loop_exit
      _
    %686 = vsyncpa [#allocation4], 1
    %s687 = scalar_lea.sflag [#allocation4], 1
    %688 = vsyncpa %s687, 1
    %689 = vsyncpa [#allocation5], 1
    %s690 = scalar_lea.sflag [#allocation5], 1
    %691 = vsyncpa %s690, 1

</llo_original>
